<compile_context>
chip_gen: v6e
topology: v6e:2x2x1
jax: 0.10.0
libtpu: 0.0.40
codegen_flags: <defaults>
</compile_context>

<pallas_src>
import functools

import jax
import jax.numpy as jnp
from jax import lax
from jax.experimental import pallas as pl
from jax.experimental.pallas import tpu as pltpu

LANE = 128
SUB = 8


def _round_up(n, m):
    return ((n + m - 1) // m) * m


def _pad_to(a, shape):
    return jnp.pad(a, [(0, s - d) for d, s in zip(a.shape, shape)])


def prepare_params(params):
    """Pad hidden/class lanes to 128 and cast MXU weights to bf16 -- ONCE.

    Kept outside the per-call forward so padded copies live in HBM permanently
    instead of being rebuilt every call.  The F axis is left unpadded so x can
    stay lane-dense (F wide) in HBM.
    """
    w1, b1, w2, b2, wk, bk, wc, bc = params
    F, H = w1.shape
    C = wc.shape[1]
    Hp = _round_up(H, LANE)
    Cp = _round_up(C, LANE)
    w1p = _pad_to(w1, (F, Hp)).astype(jnp.bfloat16)
    b1p = _pad_to(b1, (1, Hp)).astype(jnp.float32)
    w2p = _pad_to(w2, (Hp, F)).astype(jnp.bfloat16)
    b2p = b2.astype(jnp.float32)
    wkp = _pad_to(wk, (F, Hp)).astype(jnp.bfloat16)
    bkp = _pad_to(bk, (1, Hp)).astype(jnp.float32)
    wcp = _pad_to(wc, (Hp, Cp)).astype(jnp.float32)   # classifier stays f32
    bcp = _pad_to(bc, (1, Cp)).astype(jnp.float32)
    return (w1p, b1p, w2p, b2p, wkp, bkp, wcp, bcp)


def _se_kws_kernel(x_ref, w1_ref, b1_ref, w2_ref, b2_ref,
                   wk_ref, bk_ref, wc_ref, bc_ref,
                   out_ref, acc_ref, *, tile_t, t_true, needs_mask):
    t = pl.program_id(1)

    @pl.when(t == 0)
    def _init():
        acc_ref[...] = jnp.zeros_like(acc_ref)

    xb = x_ref[...]                                                     # (tile_t, F) bf16

    # ---- SE model: mask estimation + apply (bf16 MXU, f32 accumulation) ----
    h = jnp.dot(xb, w1_ref[...], preferred_element_type=jnp.float32) + b1_ref[...]
    h = jnp.maximum(h, 0.0)                                             # (tile_t, Hp) f32
    m = jnp.dot(h.astype(jnp.bfloat16), w2_ref[...],
                preferred_element_type=jnp.float32) + b2_ref[...]       # (tile_t, F) f32
    enhanced = xb.astype(jnp.float32) * jax.nn.sigmoid(m)               # (tile_t, F) f32

    # ---- KWS model: per-frame features ----
    hk = jnp.dot(enhanced.astype(jnp.bfloat16), wk_ref[...],
                 preferred_element_type=jnp.float32) + bk_ref[...]
    hk = jnp.maximum(hk, 0.0)                                           # (tile_t, Hp) f32

    if needs_mask:
        # Zero out time-padded rows (they otherwise carry relu(bk)).
        rows = t * tile_t + lax.broadcasted_iota(jnp.int32, (tile_t, 1), 0)
        hk = jnp.where(rows < t_true, hk, 0.0)

    # Temporal pooling: accumulate per-tile row sums (VPU); no pool matmul.
    acc_ref[...] += jnp.sum(hk, axis=0, keepdims=True)                  # (1, Hp) f32

    @pl.when(t == pl.num_programs(1) - 1)
    def _finalize():
        pooled = acc_ref[...] * (1.0 / t_true)                          # (1, Hp) f32
        logits = jnp.dot(pooled, wc_ref[...],
                         preferred_element_type=jnp.float32) + bc_ref[...]   # (1, Cp) f32
        out_ref[...] = jnp.broadcast_to(logits, out_ref.shape)          # lane-dense store


@functools.partial(jax.jit, static_argnames=("num_classes",))
def se_kws_forward(noisy_signal, prepared_params, *, num_classes):
    w1p, b1p, w2p, b2p, wkp, bkp, wcp, bcp = prepared_params
    B, T, F = noisy_signal.shape
    Hp = w1p.shape[1]
    Cp = wcp.shape[1]

    # Time tiling: target 256 MXU rows per step (v6e/v7x), 8-row aligned,
    # capped by T.  At the toy T=16 this is a single tile.
    tile_t = min(_round_up(T, SUB), 256)
    Tp = _round_up(T, tile_t)
    num_t = Tp // tile_t

    # bf16 x: halves the dominant HBM stream; feature axis stays unpadded.
    x = noisy_signal.astype(jnp.bfloat16)
    if Tp != T:
        x = jnp.pad(x, ((0, 0), (0, Tp - T), (0, 0)))

    kernel = functools.partial(_se_kws_kernel, tile_t=tile_t, t_true=T,
                               needs_mask=(Tp != T))

    def full(a):
        nd = a.ndim
        return pl.BlockSpec(a.shape, lambda b, t, _nd=nd: (0,) * _nd)

    logits_pad = pl.pallas_call(
        kernel,
        grid=(B, num_t),
        in_specs=[
            pl.BlockSpec((pl.Squeezed(), tile_t, F), lambda b, t: (b, t, 0)),
            full(w1p), full(b1p), full(w2p), full(b2p),
            full(wkp), full(bkp), full(wcp), full(bcp),
        ],
        out_specs=pl.BlockSpec((pl.Squeezed(), SUB, Cp), lambda b, t: (b, 0, 0)),
        out_shape=jax.ShapeDtypeStruct((B, SUB, Cp), jnp.float32),
        scratch_shapes=[pltpu.VMEM((1, Hp), jnp.float32)],
        compiler_params=pltpu.CompilerParams(
            # batch axis shards across TensorCores on v7x; time axis is the
            # pooled reduction.  (If tiles grow large on v5e, also set
            # vmem_limit_bytes here -- not needed at these sizes.)
            dimension_semantics=("parallel", "arbitrary")),
    )(x, w1p, b1p, w2p, b2p, wkp, bkp, wcp, bcp)

    return logits_pad[:, 0, :num_classes]


def reference_forward(x, params):
    w1, b1, w2, b2, wk, bk, wc, bc = params
    h = jax.nn.relu(jnp.einsum("btf,fh->bth", x, w1) + b1)
    mask = jax.nn.sigmoid(jnp.einsum("bth,hf->btf", h, w2) + b2)
    enh = x * mask
    hk = jax.nn.relu(jnp.einsum("btf,fh->bth", enh, wk) + bk)
    pooled = jnp.mean(hk, axis=1)
    return pooled @ wc + bc


if __name__ == "__main__":
    # Small shapes consistent with an SE->KWS pipeline on spectrogram frames.
    B, T, F, H, C = 2, 16, 32, 32, 12

    key = jax.random.PRNGKey(0)
    k = jax.random.split(key, 9)
    scale = 0.1
    w1 = scale * jax.random.normal(k[0], (F, H), jnp.float32)
    b1 = scale * jax.random.normal(k[1], (1, H), jnp.float32)
    w2 = scale * jax.random.normal(k[2], (H, F), jnp.float32)
    b2 = scale * jax.random.normal(k[3], (1, F), jnp.float32)
    wk = scale * jax.random.normal(k[4], (F, H), jnp.float32)
    bk = scale * jax.random.normal(k[5], (1, H), jnp.float32)
    wc = scale * jax.random.normal(k[6], (H, C), jnp.float32)
    bc = scale * jax.random.normal(k[7], (1, C), jnp.float32)
    params = (w1, b1, w2, b2, wk, bk, wc, bc)

    noisy_signal = jax.random.normal(k[8], (B, T, F), jnp.float32)

    # Pad / cast weights exactly once (outside the per-call path).
    prepared = prepare_params(params)
    jax.block_until_ready(prepared)

    logits = se_kws_forward(noisy_signal, prepared, num_classes=C)
    jax.block_until_ready(logits)

    ref = reference_forward(noisy_signal, params)
    assert logits.shape == (B, C)
    # bf16 MXU operands with f32 accumulation -> ~1e-2 tolerance vs f32 ref.
    assert jnp.allclose(logits, ref, atol=1e-2, rtol=1e-2), "mismatch vs reference"

    print("KERNEL_OK")
</pallas_src>

<mosaic_0001>
module attributes {stable_mosaic.version = 11 : i64} {
  func.func @_se_kws_kernel(%arg0: i32, %arg1: i32, %arg2: memref<1x16x32xbf16, #tpu.memory_space<vmem>>, %arg3: memref<32x128xbf16, #tpu.memory_space<vmem>>, %arg4: memref<1x128xf32, #tpu.memory_space<vmem>>, %arg5: memref<128x32xbf16, #tpu.memory_space<vmem>>, %arg6: memref<1x32xf32, #tpu.memory_space<vmem>>, %arg7: memref<32x128xbf16, #tpu.memory_space<vmem>>, %arg8: memref<1x128xf32, #tpu.memory_space<vmem>>, %arg9: memref<128x128xf32, #tpu.memory_space<vmem>>, %arg10: memref<1x128xf32, #tpu.memory_space<vmem>>, %arg11: memref<1x8x128xf32, #tpu.memory_space<vmem>>, %arg12: memref<1x128xf32, #tpu.memory_space<vmem>>) attributes {dimension_semantics = [#tpu.dimension_semantics<parallel>, #tpu.dimension_semantics<arbitrary>], iteration_bounds = array<i64: 2, 1>, scalar_prefetch = 0 : i64, scratch_operands = 1 : i64, tpu.core_type = #tpu.core_type<tc>, window_params = [{transform_indices = @transform_0, window_bounds = array<i64: 1, 16, 32>}, {pipeline_mode = #tpu.pipeline_mode<synchronous>, transform_indices = @transform_1, window_bounds = array<i64: 32, 128>}, {pipeline_mode = #tpu.pipeline_mode<synchronous>, transform_indices = @transform_2, window_bounds = array<i64: 1, 128>}, {pipeline_mode = #tpu.pipeline_mode<synchronous>, transform_indices = @transform_3, window_bounds = array<i64: 128, 32>}, {pipeline_mode = #tpu.pipeline_mode<synchronous>, transform_indices = @transform_4, window_bounds = array<i64: 1, 32>}, {pipeline_mode = #tpu.pipeline_mode<synchronous>, transform_indices = @transform_5, window_bounds = array<i64: 32, 128>}, {pipeline_mode = #tpu.pipeline_mode<synchronous>, transform_indices = @transform_6, window_bounds = array<i64: 1, 128>}, {pipeline_mode = #tpu.pipeline_mode<synchronous>, transform_indices = @transform_7, window_bounds = array<i64: 128, 128>}, {pipeline_mode = #tpu.pipeline_mode<synchronous>, transform_indices = @transform_8, window_bounds = array<i64: 1, 128>}, {transform_indices = @transform_9, window_bounds = array<i64: 1, 8, 128>}]} {
    %c0_i32 = arith.constant 0 : i32
    %0 = arith.cmpi eq, %arg1, %c0_i32 : i32
    %1 = arith.extui %0 : i1 to i32
    %c0_i32_0 = arith.constant 0 : i32
    %2 = arith.cmpi ne, %1, %c0_i32_0 : i32
    scf.if %2 {
      %cst_27 = arith.constant 0.000000e+00 : f32
      %41 = vector.broadcast %cst_27 : f32 to vector<1x128xf32>
      %c0_28 = arith.constant 0 : index
      %c0_29 = arith.constant 0 : index
      %42 = vector.load %arg12[%c0_28, %c0_29] : memref<1x128xf32, #tpu.memory_space<vmem>>, vector<1x128xf32>
      tpu.vector_store %arg12[%c0_28, %c0_29], %41 {strides = array<i32>} : memref<1x128xf32, #tpu.memory_space<vmem>>, vector<1x128xf32>,
    } else {
    }
    %c0 = arith.constant 0 : index
    %c0_1 = arith.constant 0 : index
    %c0_2 = arith.constant 0 : index
    %3 = vector.load %arg2[%c0, %c0_1, %c0_2] : memref<1x16x32xbf16, #tpu.memory_space<vmem>>, vector<1x16x32xbf16>
    %4 = vector.shape_cast %3 : vector<1x16x32xbf16> to vector<16x32xbf16>
    %c0_3 = arith.constant 0 : index
    %c0_4 = arith.constant 0 : index
    %5 = vector.load %arg3[%c0_3, %c0_4] : memref<32x128xbf16, #tpu.memory_space<vmem>>, vector<32x128xbf16>
    %cst = arith.constant dense<0.000000e+00> : vector<16x128xf32>
    %6 = tpu.matmul %4, %5, %cst {dimension_numbers = #tpu.dot_dimension_numbers<[1], [0], [0], [1], [0, 0, 1, 1], [], []>} : vector<16x32xbf16>, vector<32x128xbf16>, vector<16x128xf32> -> vector<16x128xf32>
    %c0_5 = arith.constant 0 : index
    %c0_6 = arith.constant 0 : index
    %7 = vector.load %arg4[%c0_5, %c0_6] : memref<1x128xf32, #tpu.memory_space<vmem>>, vector<1x128xf32>
    %8 = vector.broadcast %7 : vector<1x128xf32> to vector<16x128xf32>
    %9 = arith.addf %6, %8 : vector<16x128xf32>
    %cst_7 = arith.constant 0.000000e+00 : f32
    %10 = vector.broadcast %cst_7 : f32 to vector<16x128xf32>
    %11 = arith.maximumf %9, %10 : vector<16x128xf32>
    %12 = arith.truncf %11 : vector<16x128xf32> to vector<16x128xbf16>
    %c0_8 = arith.constant 0 : index
    %c0_9 = arith.constant 0 : index
    %13 = vector.load %arg5[%c0_8, %c0_9] : memref<128x32xbf16, #tpu.memory_space<vmem>>, vector<128x32xbf16>
    %cst_10 = arith.constant dense<0.000000e+00> : vector<16x32xf32>
    %14 = tpu.matmul %12, %13, %cst_10 {dimension_numbers = #tpu.dot_dimension_numbers<[1], [0], [0], [1], [0, 0, 1, 1], [], []>} : vector<16x128xbf16>, vector<128x32xbf16>, vector<16x32xf32> -> vector<16x32xf32>
    %c0_11 = arith.constant 0 : index
    %c0_12 = arith.constant 0 : index
    %15 = vector.load %arg6[%c0_11, %c0_12] : memref<1x32xf32, #tpu.memory_space<vmem>>, vector<1x32xf32>
    %16 = vector.broadcast %15 : vector<1x32xf32> to vector<16x32xf32>
    %17 = arith.addf %14, %16 : vector<16x32xf32>
    %18 = arith.extf %4 : vector<16x32xbf16> to vector<16x32xf32>
    %19 = arith.negf %17 : vector<16x32xf32>
    %20 = math.exp %19 : vector<16x32xf32>
    %cst_13 = arith.constant 1.000000e+00 : f32
    %21 = vector.broadcast %cst_13 : f32 to vector<16x32xf32>
    %22 = arith.addf %21, %20 : vector<16x32xf32>
    %23 = arith.divf %21, %22 : vector<16x32xf32>
    %24 = arith.mulf %18, %23 : vector<16x32xf32>
    %25 = arith.truncf %24 : vector<16x32xf32> to vector<16x32xbf16>
    %c0_14 = arith.constant 0 : index
    %c0_15 = arith.constant 0 : index
    %26 = vector.load %arg7[%c0_14, %c0_15] : memref<32x128xbf16, #tpu.memory_space<vmem>>, vector<32x128xbf16>
    %cst_16 = arith.constant dense<0.000000e+00> : vector<16x128xf32>
    %27 = tpu.matmul %25, %26, %cst_16 {dimension_numbers = #tpu.dot_dimension_numbers<[1], [0], [0], [1], [0, 0, 1, 1], [], []>} : vector<16x32xbf16>, vector<32x128xbf16>, vector<16x128xf32> -> vector<16x128xf32>
    %c0_17 = arith.constant 0 : index
    %c0_18 = arith.constant 0 : index
    %28 = vector.load %arg8[%c0_17, %c0_18] : memref<1x128xf32, #tpu.memory_space<vmem>>, vector<1x128xf32>
    %29 = vector.broadcast %28 : vector<1x128xf32> to vector<16x128xf32>
    %30 = arith.addf %27, %29 : vector<16x128xf32>
    %cst_19 = arith.constant 0.000000e+00 : f32
    %31 = vector.broadcast %cst_19 : f32 to vector<16x128xf32>
    %32 = arith.maximumf %30, %31 : vector<16x128xf32>
    %c0_20 = arith.constant 0 : index
    %c0_21 = arith.constant 0 : index
    %33 = vector.load %arg12[%c0_20, %c0_21] : memref<1x128xf32, #tpu.memory_space<vmem>>, vector<1x128xf32>
    %cst_22 = arith.constant dense<0.000000e+00> : vector<128xf32>
    %34 = vector.multi_reduction <add>, %32, %cst_22 [0] : vector<16x128xf32> to vector<128xf32>
    %35 = vector.shape_cast %34 : vector<128xf32> to vector<1x128xf32>
    %36 = arith.addf %33, %35 : vector<1x128xf32>
    %c0_23 = arith.constant 0 : index
    %c0_24 = arith.constant 0 : index
    %37 = vector.load %arg12[%c0_23, %c0_24] : memref<1x128xf32, #tpu.memory_space<vmem>>, vector<1x128xf32>
    tpu.vector_store %arg12[%c0_23, %c0_24], %36 {strides = array<i32>} : memref<1x128xf32, #tpu.memory_space<vmem>>, vector<1x128xf32>,
    %c0_i32_25 = arith.constant 0 : i32
    %38 = arith.cmpi eq, %arg1, %c0_i32_25 : i32
    %39 = arith.extui %38 : i1 to i32
    %c0_i32_26 = arith.constant 0 : i32
    %40 = arith.cmpi ne, %39, %c0_i32_26 : i32
    scf.if %40 {
      %c0_27 = arith.constant 0 : index
      %c0_28 = arith.constant 0 : index
      %41 = vector.load %arg12[%c0_27, %c0_28] : memref<1x128xf32, #tpu.memory_space<vmem>>, vector<1x128xf32>
      %cst_29 = arith.constant 6.250000e-02 : f32
      %42 = vector.broadcast %cst_29 : f32 to vector<1x128xf32>
      %43 = arith.mulf %41, %42 : vector<1x128xf32>
      %c0_30 = arith.constant 0 : index
      %c0_31 = arith.constant 0 : index
      %44 = vector.load %arg9[%c0_30, %c0_31] : memref<128x128xf32, #tpu.memory_space<vmem>>, vector<128x128xf32>
      %cst_32 = arith.constant dense<0.000000e+00> : vector<1x128xf32>
      %45 = tpu.matmul %43, %44, %cst_32 {dimension_numbers = #tpu.dot_dimension_numbers<[1], [0], [0], [1], [0, 0, 1, 1], [], []>} : vector<1x128xf32>, vector<128x128xf32>, vector<1x128xf32> -> vector<1x128xf32>
      %c0_33 = arith.constant 0 : index
      %c0_34 = arith.constant 0 : index
      %46 = vector.load %arg10[%c0_33, %c0_34] : memref<1x128xf32, #tpu.memory_space<vmem>>, vector<1x128xf32>
      %47 = arith.addf %45, %46 : vector<1x128xf32>
      %48 = vector.shape_cast %47 : vector<1x128xf32> to vector<1x128xf32>
      %49 = vector.broadcast %48 : vector<1x128xf32> to vector<8x128xf32>
      %c0_35 = arith.constant 0 : index
      %c0_36 = arith.constant 0 : index
      %c0_37 = arith.constant 0 : index
      %50 = vector.load %arg11[%c0_35, %c0_36, %c0_37] : memref<1x8x128xf32, #tpu.memory_space<vmem>>, vector<1x8x128xf32>
      %51 = vector.shape_cast %50 : vector<1x8x128xf32> to vector<8x128xf32>
      %52 = vector.shape_cast %49 : vector<8x128xf32> to vector<1x8x128xf32>
      tpu.vector_store %arg11[%c0_35, %c0_36, %c0_37], %52 {strides = array<i32>} : memref<1x8x128xf32, #tpu.memory_space<vmem>>, vector<1x8x128xf32>,
    } else {
    }
    return
  }
  func.func @transform_0(%arg0: i32, %arg1: i32) -> (i32, i32, i32) {
    %c0_i32 = arith.constant 0 : i32
    %c0_i32_0 = arith.constant 0 : i32
    return %arg0, %arg1, %c0_i32 : i32, i32, i32
  }
  func.func @transform_1(%arg0: i32, %arg1: i32) -> (i32, i32) {
    %c0_i32 = arith.constant 0 : i32
    %c0_i32_0 = arith.constant 0 : i32
    %c0_i32_1 = arith.constant 0 : i32
    return %c0_i32, %c0_i32_0 : i32, i32
  }
  func.func @transform_2(%arg0: i32, %arg1: i32) -> (i32, i32) {
    %c0_i32 = arith.constant 0 : i32
    %c0_i32_0 = arith.constant 0 : i32
    %c0_i32_1 = arith.constant 0 : i32
    return %c0_i32, %c0_i32_0 : i32, i32
  }
  func.func @transform_3(%arg0: i32, %arg1: i32) -> (i32, i32) {
    %c0_i32 = arith.constant 0 : i32
    %c0_i32_0 = arith.constant 0 : i32
    %c0_i32_1 = arith.constant 0 : i32
    return %c0_i32, %c0_i32_0 : i32, i32
  }
  func.func @transform_4(%arg0: i32, %arg1: i32) -> (i32, i32) {
    %c0_i32 = arith.constant 0 : i32
    %c0_i32_0 = arith.constant 0 : i32
    %c0_i32_1 = arith.constant 0 : i32
    return %c0_i32, %c0_i32_0 : i32, i32
  }
  func.func @transform_5(%arg0: i32, %arg1: i32) -> (i32, i32) {
    %c0_i32 = arith.constant 0 : i32
    %c0_i32_0 = arith.constant 0 : i32
    %c0_i32_1 = arith.constant 0 : i32
    return %c0_i32, %c0_i32_0 : i32, i32
  }
  func.func @transform_6(%arg0: i32, %arg1: i32) -> (i32, i32) {
    %c0_i32 = arith.constant 0 : i32
    %c0_i32_0 = arith.constant 0 : i32
    %c0_i32_1 = arith.constant 0 : i32
    return %c0_i32, %c0_i32_0 : i32, i32
  }
  func.func @transform_7(%arg0: i32, %arg1: i32) -> (i32, i32) {
    %c0_i32 = arith.constant 0 : i32
    %c0_i32_0 = arith.constant 0 : i32
    %c0_i32_1 = arith.constant 0 : i32
    return %c0_i32, %c0_i32_0 : i32, i32
  }
  func.func @transform_8(%arg0: i32, %arg1: i32) -> (i32, i32) {
    %c0_i32 = arith.constant 0 : i32
    %c0_i32_0 = arith.constant 0 : i32
    %c0_i32_1 = arith.constant 0 : i32
    return %c0_i32, %c0_i32_0 : i32, i32
  }
  func.func @transform_9(%arg0: i32, %arg1: i32) -> (i32, i32, i32) {
    %c0_i32 = arith.constant 0 : i32
    %c0_i32_0 = arith.constant 0 : i32
    %c0_i32_1 = arith.constant 0 : i32
    return %arg0, %c0_i32, %c0_i32_0 : i32, i32, i32
  }
}

</mosaic_0001>

<llo_original>
// kernel: se_kws_forward.1
$region0: #{se_kws_forward.1}
  #allocation0 [shape = 'u32[]', space=smem, size = 0x4, offset = 0x4, fixed_abs, tag = 'smem constant byte address 0x4 - core index']
  #allocation1 [shape = 'u32[144,128]{1,0:T(1,128)}', space=vmem, size = 0x12000, scoped, tag = 'internal scratch']
  #allocation2 [shape = 'f32[1,128]{1,0:T(1,128)}', space=vmem, size = 0x200, scoped, tag = 'scratch operand']
  %s0 = inlined_call_operand.vmem [shape: bf16[2,16,32], index: 0, kind: input, shape index: {}]
  %s1 = inlined_call_operand.hbm [shape: bf16[32,128], index: 1, kind: input, shape index: {}]
  %s2 = inlined_call_operand.vmem [shape: f32[1,128], index: 2, kind: input, shape index: {}]
  %s3 = inlined_call_operand.vmem [shape: bf16[128,32], index: 3, kind: input, shape index: {}]
  %s4 = inlined_call_operand.vmem [shape: f32[1,32], index: 4, kind: input, shape index: {}]
  %s5 = inlined_call_operand.hbm [shape: bf16[32,128], index: 5, kind: input, shape index: {}]
  %s6 = inlined_call_operand.vmem [shape: f32[1,128], index: 6, kind: input, shape index: {}]
  %s7 = inlined_call_operand.vmem [shape: f32[128,128], index: 7, kind: input, shape index: {}]
  %s8 = inlined_call_operand.vmem [shape: f32[1,128], index: 8, kind: input, shape index: {}]
  %s9 = inlined_call_operand.vmem [shape: f32[2,8,128], index: 9, kind: output, shape index: {}]
  %s10 = sld [smem:[#allocation0]]
  $region85: #{se_kws_forward.1} parent=0
    _
  %s12 = ssub.s32 1, %s10
  %s13 = scalar_select 0, %s12, %s10
  $region1: #{se_kws_forward.1} parent=0
    #allocation3 [shape = 'u8[8192]{0}', space=vmem, size = 0x2000, scoped, tag = 'input window, operand 1, single buffered']
    #allocation4 [shape = 's32[2]{0}', space=sflag, size = 0x8, scoped, tag = 'scoped memory for se_kws_forward.1']
    #allocation5 [shape = 'u8[8192]{0}', space=vmem, size = 0x2000, scoped, tag = 'input window, operand 5, single buffered']
    #allocation6 [shape = 's32[1]{0}', space=sflag, size = 0x4, scoped, tag = 'scoped memory for se_kws_forward.1']
    %14 = vsyncpa [#allocation4], 0
    %15 = vsyncpa [#allocation6], 0
    loop: start=0, step=1, limit=4
    $region2: #{se_kws_forward.1} parent=1 // loop_pre_header
      _
    $region3: #{se_kws_forward.1} parent=1 // loop_header
      %s17 = sphi 0, %s21
      %p18 = scmp.ge.s32.totalorder %s17, 4
      %s24 = sphi 0, %s36
      %s25 = sphi 0, %s32
      %s26 = sphi 0, %s24
      %s27 = sphi 0, %s25
      %s28 = sphi 0, %s26
      %s29 = sphi 0, %s27
      %s41 = sphi 0, %s43
      %s44 = sphi 0, %s41
      %s45 = sphi 0, %s44
      %s61 = sphi 0, %s45
      %s65 = sphi 0, %s65
      %s67 = sphi 0, %s65
      %s68 = sphi 0, %s67
      %s82 = sphi 0, %s68
      %s86 = sphi 0, %s86
      %s88 = sphi 0, %s86
      %s89 = sphi 0, %s88
      %s103 = sphi 0, %s89
      %s107 = sphi 0, %s107
      %s109 = sphi 0, %s107
      %s110 = sphi 0, %s109
      %s124 = sphi 0, %s110
      %s128 = sphi 0, %s128
      %s130 = sphi 0, %s128
      %s131 = sphi 0, %s130
      %s145 = sphi 0, %s131
      %s149 = sphi 0, %s149
      %s151 = sphi 0, %s149
      %s152 = sphi 0, %s151
      %s166 = sphi 0, %s152
      %s170 = sphi 0, %s170
      %s172 = sphi 0, %s170
      %s173 = sphi 0, %s172
      %s187 = sphi 0, %s173
      %s191 = sphi 0, %s191
      %s193 = sphi 0, %s191
      %s194 = sphi 0, %s193
      %s208 = sphi 0, %s194
      %s212 = sphi 0, %s212
      %s214 = sphi 0, %s212
      %s215 = sphi 0, %s214
      %s229 = sphi 0, %s215
      %s235 = sphi 0, %s237
      %s238 = sphi 0, %s235
      %s239 = sphi 0, %s238
      %s255 = sphi 0, %s239
    $region4: #{se_kws_forward.1} parent=1 // loop_header_branch
      %20 = sbr.rel (%p18) target = $region8
    $region5: #{se_kws_forward.1} parent=1 // loop_body
      %s22 = ssub.s32 %s17, 1
      %s23 = ssub.s32 %s17, 2
      %s30 = sadd.s32 1, %s25
      %p31 = scmp.ge.s32.totalorder %s30, 1
      %s32 = scalar_select %p31, 0, %s30
      %s33 = sadd.s32 1, %s24
      %s34 = scalar_select %p31, %s33, %s24
      %p35 = scmp.ge.s32.totalorder %s34, 2
      %s36 = scalar_select %p35, 0, %s34
      %s37 = ssub.s32 %s24, %s36
      %s38 = ssub.s32 %s25, %s32
      %s39 = sor.u32 %s37, %s38
      %p40 = scmp.eq.s32.totalorder %s39, 0
      %s42 = sadd.s32 %s41, 1
      %s43 = scalar_select %p40, %s41, %s42
      %p46 = pneg %p40
      %p47 = scmp.eq.s32.totalorder %s17, 1
      %p48 = por %p46, %p47
      %p49 = scmp.ne.s32.totalorder %s41, %s44
      %p50 = scmp.eq.s32.totalorder %s17, 0
      %p51 = por %p49, %p50
      %p52 = scmp.ne.s32.totalorder %s41, %s44
      %p53 = scmp.eq.s32.totalorder %s22, 1
      %p54 = por %p52, %p53
      %p55 = scmp.ne.s32.totalorder %s44, %s45
      %p56 = scmp.eq.s32.totalorder %s22, 0
      %p57 = por %p55, %p56
      %p58 = scmp.ne.s32.totalorder %s44, %s45
      %p59 = scmp.eq.s32.totalorder %s23, 1
      %p60 = por %p58, %p59
      %p62 = scmp.ne.s32.totalorder %s45, %s61
      %p63 = scmp.eq.s32.totalorder %s23, 0
      %p64 = por %p62, %p63
      %s66 = sadd.s32 %s65, 1
      %p69 = scmp.eq.s32.totalorder %s17, 1
      %p70 = scmp.ne.s32.totalorder %s65, %s67
      %p71 = scmp.eq.s32.totalorder %s17, 0
      %p72 = por %p70, %p71
      %p73 = scmp.ne.s32.totalorder %s65, %s67
      %p74 = scmp.eq.s32.totalorder %s22, 1
      %p75 = por %p73, %p74
      %p76 = scmp.ne.s32.totalorder %s67, %s68
      %p77 = scmp.eq.s32.totalorder %s22, 0
      %p78 = por %p76, %p77
      %p79 = scmp.ne.s32.totalorder %s67, %s68
      %p80 = scmp.eq.s32.totalorder %s23, 1
      %p81 = por %p79, %p80
      %p83 = scmp.ne.s32.totalorder %s68, %s82
      %p84 = scmp.eq.s32.totalorder %s23, 0
      %p85 = por %p83, %p84
      %s87 = sadd.s32 %s86, 1
      %p90 = scmp.eq.s32.totalorder %s17, 1
      %p91 = scmp.ne.s32.totalorder %s86, %s88
      %p92 = scmp.eq.s32.totalorder %s17, 0
      %p93 = por %p91, %p92
      %p94 = scmp.ne.s32.totalorder %s86, %s88
      %p95 = scmp.eq.s32.totalorder %s22, 1
      %p96 = por %p94, %p95
      %p97 = scmp.ne.s32.totalorder %s88, %s89
      %p98 = scmp.eq.s32.totalorder %s22, 0
      %p99 = por %p97, %p98
      %p100 = scmp.ne.s32.totalorder %s88, %s89
      %p101 = scmp.eq.s32.totalorder %s23, 1
      %p102 = por %p100, %p101
      %p104 = scmp.ne.s32.totalorder %s89, %s103
      %p105 = scmp.eq.s32.totalorder %s23, 0
      %p106 = por %p104, %p105
      %s108 = sadd.s32 %s107, 1
      %p111 = scmp.eq.s32.totalorder %s17, 1
      %p112 = scmp.ne.s32.totalorder %s107, %s109
      %p113 = scmp.eq.s32.totalorder %s17, 0
      %p114 = por %p112, %p113
      %p115 = scmp.ne.s32.totalorder %s107, %s109
      %p116 = scmp.eq.s32.totalorder %s22, 1
      %p117 = por %p115, %p116
      %p118 = scmp.ne.s32.totalorder %s109, %s110
      %p119 = scmp.eq.s32.totalorder %s22, 0
      %p120 = por %p118, %p119
      %p121 = scmp.ne.s32.totalorder %s109, %s110
      %p122 = scmp.eq.s32.totalorder %s23, 1
      %p123 = por %p121, %p122
      %p125 = scmp.ne.s32.totalorder %s110, %s124
      %p126 = scmp.eq.s32.totalorder %s23, 0
      %p127 = por %p125, %p126
      %s129 = sadd.s32 %s128, 1
      %p132 = scmp.eq.s32.totalorder %s17, 1
      %p133 = scmp.ne.s32.totalorder %s128, %s130
      %p134 = scmp.eq.s32.totalorder %s17, 0
      %p135 = por %p133, %p134
      %p136 = scmp.ne.s32.totalorder %s128, %s130
      %p137 = scmp.eq.s32.totalorder %s22, 1
      %p138 = por %p136, %p137
      %p139 = scmp.ne.s32.totalorder %s130, %s131
      %p140 = scmp.eq.s32.totalorder %s22, 0
      %p141 = por %p139, %p140
      %p142 = scmp.ne.s32.totalorder %s130, %s131
      %p143 = scmp.eq.s32.totalorder %s23, 1
      %p144 = por %p142, %p143
      %p146 = scmp.ne.s32.totalorder %s131, %s145
      %p147 = scmp.eq.s32.totalorder %s23, 0
      %p148 = por %p146, %p147
      %s150 = sadd.s32 %s149, 1
      %p153 = scmp.eq.s32.totalorder %s17, 1
      %p154 = scmp.ne.s32.totalorder %s149, %s151
      %p155 = scmp.eq.s32.totalorder %s17, 0
      %p156 = por %p154, %p155
      %p157 = scmp.ne.s32.totalorder %s149, %s151
      %p158 = scmp.eq.s32.totalorder %s22, 1
      %p159 = por %p157, %p158
      %p160 = scmp.ne.s32.totalorder %s151, %s152
      %p161 = scmp.eq.s32.totalorder %s22, 0
      %p162 = por %p160, %p161
      %p163 = scmp.ne.s32.totalorder %s151, %s152
      %p164 = scmp.eq.s32.totalorder %s23, 1
      %p165 = por %p163, %p164
      %p167 = scmp.ne.s32.totalorder %s152, %s166
      %p168 = scmp.eq.s32.totalorder %s23, 0
      %p169 = por %p167, %p168
      %s171 = sadd.s32 %s170, 1
      %p174 = scmp.eq.s32.totalorder %s17, 1
      %p175 = scmp.ne.s32.totalorder %s170, %s172
      %p176 = scmp.eq.s32.totalorder %s17, 0
      %p177 = por %p175, %p176
      %p178 = scmp.ne.s32.totalorder %s170, %s172
      %p179 = scmp.eq.s32.totalorder %s22, 1
      %p180 = por %p178, %p179
      %p181 = scmp.ne.s32.totalorder %s172, %s173
      %p182 = scmp.eq.s32.totalorder %s22, 0
      %p183 = por %p181, %p182
      %p184 = scmp.ne.s32.totalorder %s172, %s173
      %p185 = scmp.eq.s32.totalorder %s23, 1
      %p186 = por %p184, %p185
      %p188 = scmp.ne.s32.totalorder %s173, %s187
      %p189 = scmp.eq.s32.totalorder %s23, 0
      %p190 = por %p188, %p189
      %s192 = sadd.s32 %s191, 1
      %p195 = scmp.eq.s32.totalorder %s17, 1
      %p196 = scmp.ne.s32.totalorder %s191, %s193
      %p197 = scmp.eq.s32.totalorder %s17, 0
      %p198 = por %p196, %p197
      %p199 = scmp.ne.s32.totalorder %s191, %s193
      %p200 = scmp.eq.s32.totalorder %s22, 1
      %p201 = por %p199, %p200
      %p202 = scmp.ne.s32.totalorder %s193, %s194
      %p203 = scmp.eq.s32.totalorder %s22, 0
      %p204 = por %p202, %p203
      %p205 = scmp.ne.s32.totalorder %s193, %s194
      %p206 = scmp.eq.s32.totalorder %s23, 1
      %p207 = por %p205, %p206
      %p209 = scmp.ne.s32.totalorder %s194, %s208
      %p210 = scmp.eq.s32.totalorder %s23, 0
      %p211 = por %p209, %p210
      %s213 = sadd.s32 %s212, 1
      %p216 = scmp.eq.s32.totalorder %s17, 1
      %p217 = scmp.ne.s32.totalorder %s212, %s214
      %p218 = scmp.eq.s32.totalorder %s17, 0
      %p219 = por %p217, %p218
      %p220 = scmp.ne.s32.totalorder %s212, %s214
      %p221 = scmp.eq.s32.totalorder %s22, 1
      %p222 = por %p220, %p221
      %p223 = scmp.ne.s32.totalorder %s214, %s215
      %p224 = scmp.eq.s32.totalorder %s22, 0
      %p225 = por %p223, %p224
      %p226 = scmp.ne.s32.totalorder %s214, %s215
      %p227 = scmp.eq.s32.totalorder %s23, 1
      %p228 = por %p226, %p227
      %p230 = scmp.ne.s32.totalorder %s215, %s229
      %p231 = scmp.eq.s32.totalorder %s23, 0
      %p232 = por %p230, %p231
      %s233 = ssub.s32 %s24, %s36
      %p234 = scmp.eq.s32.totalorder %s233, 0
      %s236 = sadd.s32 %s235, 1
      %s237 = scalar_select %p234, %s235, %s236
      %p240 = pneg %p234
      %p241 = scmp.eq.s32.totalorder %s17, 1
      %p242 = por %p240, %p241
      %p243 = scmp.ne.s32.totalorder %s235, %s238
      %p244 = scmp.eq.s32.totalorder %s17, 0
      %p245 = por %p243, %p244
      %p246 = scmp.ne.s32.totalorder %s235, %s238
      %p247 = scmp.eq.s32.totalorder %s22, 1
      %p248 = por %p246, %p247
      %p249 = scmp.ne.s32.totalorder %s238, %s239
      %p250 = scmp.eq.s32.totalorder %s22, 0
      %p251 = por %p249, %p250
      %p252 = scmp.ne.s32.totalorder %s238, %s239
      %p253 = scmp.eq.s32.totalorder %s23, 1
      %p254 = por %p252, %p253
      %p256 = scmp.ne.s32.totalorder %s239, %s255
      %p257 = scmp.eq.s32.totalorder %s23, 0
      %p258 = por %p256, %p257
      %p259 = scmp.le.s32.totalorder 1, %s17
      %p260 = scmp.lt.s32.totalorder %s17, 3
      %p261 = pnand %p259, %p260
      %p262 = pneg %p261
      // Predicated region
      $region9: #{se_kws_forward.1} parent=5 // pred_check
        _
      $region10: #{se_kws_forward.1} parent=5 // pred_check_branch
        %264 = sbr.rel (%p261) target = $region12
      $region11: #{se_kws_forward.1} parent=5 // pred_region
        %s265 = ssub.s32 %s17, 1
        // Predicated region
        $region13: #{se_kws_forward.1} parent=11 // pred_check
          %p266 = pneg %p78
        $region14: #{se_kws_forward.1} parent=11 // pred_check_branch
          %268 = sbr.rel (%p266) target = $region16
        $region15: #{se_kws_forward.1} parent=11 // pred_region
          %s270 = ssub.s32 256, 256
          %271 = vsyncadd [#allocation4], %s270
          %s272 = sshll.u32 [#allocation3], 4
          %s273 = int_to_ptr.vmem [resolvable:$true] %s272
          %278 = dma.hbm_to_vmem [thread:$0]  %s1, 256, %s273, [#allocation4], 64, 64, 4
        $region16: #{se_kws_forward.1} parent=11 // pred_fallthru
          _
        // Predicated region
        $region17: #{se_kws_forward.1} parent=11 // pred_check
          %p279 = pneg %p99
        $region18: #{se_kws_forward.1} parent=11 // pred_check_branch
          %281 = sbr.rel (%p279) target = $region20
        $region19: #{se_kws_forward.1} parent=11 // pred_region
          _
        $region20: #{se_kws_forward.1} parent=11 // pred_fallthru
          _
        // Predicated region
        $region21: #{se_kws_forward.1} parent=11 // pred_check
          %p282 = pneg %p120
        $region22: #{se_kws_forward.1} parent=11 // pred_check_branch
          %284 = sbr.rel (%p282) target = $region24
        $region23: #{se_kws_forward.1} parent=11 // pred_region
          _
        $region24: #{se_kws_forward.1} parent=11 // pred_fallthru
          _
        // Predicated region
        $region25: #{se_kws_forward.1} parent=11 // pred_check
          %p285 = pneg %p141
        $region26: #{se_kws_forward.1} parent=11 // pred_check_branch
          %287 = sbr.rel (%p285) target = $region28
        $region27: #{se_kws_forward.1} parent=11 // pred_region
          _
        $region28: #{se_kws_forward.1} parent=11 // pred_fallthru
          _
        // Predicated region
        $region29: #{se_kws_forward.1} parent=11 // pred_check
          %p288 = pneg %p162
        $region30: #{se_kws_forward.1} parent=11 // pred_check_branch
          %290 = sbr.rel (%p288) target = $region32
        $region31: #{se_kws_forward.1} parent=11 // pred_region
          %s292 = ssub.s32 256, 256
          %293 = vsyncadd [#allocation6], %s292
          %s294 = sshll.u32 [#allocation5], 4
          %s295 = int_to_ptr.vmem [resolvable:$true] %s294
          %300 = dma.hbm_to_vmem [thread:$0]  %s5, 256, %s295, [#allocation6], 64, 64, 4
        $region32: #{se_kws_forward.1} parent=11 // pred_fallthru
          _
        // Predicated region
        $region33: #{se_kws_forward.1} parent=11 // pred_check
          %p301 = pneg %p183
        $region34: #{se_kws_forward.1} parent=11 // pred_check_branch
          %303 = sbr.rel (%p301) target = $region36
        $region35: #{se_kws_forward.1} parent=11 // pred_region
          _
        $region36: #{se_kws_forward.1} parent=11 // pred_fallthru
          _
        // Predicated region
        $region37: #{se_kws_forward.1} parent=11 // pred_check
          %p304 = pneg %p204
        $region38: #{se_kws_forward.1} parent=11 // pred_check_branch
          %306 = sbr.rel (%p304) target = $region40
        $region39: #{se_kws_forward.1} parent=11 // pred_region
          _
        $region40: #{se_kws_forward.1} parent=11 // pred_fallthru
          _
        // Predicated region
        $region41: #{se_kws_forward.1} parent=11 // pred_check
          %p307 = pneg %p225
        $region42: #{se_kws_forward.1} parent=11 // pred_check_branch
          %309 = sbr.rel (%p307) target = $region44
        $region43: #{se_kws_forward.1} parent=11 // pred_region
          _
        $region44: #{se_kws_forward.1} parent=11 // pred_fallthru
          _
      $region12: #{se_kws_forward.1} parent=5 // pred_fallthru
        _
      %p310 = scmp.lt.s32.totalorder %s17, 2
      // Predicated region
      $region45: #{se_kws_forward.1} parent=5 // pred_check
        %p311 = pneg %p310
      $region46: #{se_kws_forward.1} parent=5 // pred_check_branch
        %313 = sbr.rel (%p311) target = $region48
      $region47: #{se_kws_forward.1} parent=5 // pred_region
        // Predicated region
        $region49: #{se_kws_forward.1} parent=47 // pred_check
          %p314 = pneg %p51
        $region50: #{se_kws_forward.1} parent=47 // pred_check_branch
          %316 = sbr.rel (%p314) target = $region52
        $region51: #{se_kws_forward.1} parent=47 // pred_region
          %s317 = smul.u32 2, %s25
          %p318 = scmp.lt.s32.totalorder %s24, 1
          %s319 = scalar_select %p318, %s24, 1
          %p320 = scmp.lt.s32.totalorder %s317, 1
          %s321 = scalar_select %p320, %s317, 1
          %s322 = smul.addr %s319, 2
          %s323 = sadd.s32 %s321, %s322
          %s324 = smul.addr %s323, 4
          %s325 = scalar_lea.vmem %s0, %s324
          %s326 = smul.u32 2, %s25
        $region52: #{se_kws_forward.1} parent=47 // pred_fallthru
          _
      $region48: #{se_kws_forward.1} parent=5 // pred_fallthru
        _
      %p327 = scmp.le.s32.totalorder 1, %s17
      %p328 = scmp.lt.s32.totalorder %s17, 3
      %p329 = pnand %p327, %p328
      %p330 = pneg %p329
      // Predicated region
      $region53: #{se_kws_forward.1} parent=5 // pred_check
        _
      $region54: #{se_kws_forward.1} parent=5 // pred_check_branch
        %332 = sbr.rel (%p329) target = $region56
      $region55: #{se_kws_forward.1} parent=5 // pred_region
        %s333 = ssub.s32 %s17, 1
        // Predicated region
        $region57: #{se_kws_forward.1} parent=55 // pred_check
          %p334 = pneg %p78
        $region58: #{se_kws_forward.1} parent=55 // pred_check_branch
          %336 = sbr.rel (%p334) target = $region60
        $region59: #{se_kws_forward.1} parent=55 // pred_region
          %337 = dma.done [#allocation4], 256
        $region60: #{se_kws_forward.1} parent=55 // pred_fallthru
          _
        // Predicated region
        $region61: #{se_kws_forward.1} parent=55 // pred_check
          %p338 = pneg %p162
        $region62: #{se_kws_forward.1} parent=55 // pred_check_branch
          %340 = sbr.rel (%p338) target = $region64
        $region63: #{se_kws_forward.1} parent=55 // pred_region
          %341 = dma.done [#allocation6], 256
        $region64: #{se_kws_forward.1} parent=55 // pred_fallthru
          _
        %s342 = smul.u32 2, %s27
        %p343 = scmp.lt.s32.totalorder %s26, 1
        %s344 = scalar_select %p343, %s26, 1
        %p345 = scmp.lt.s32.totalorder %s342, 1
        %s346 = scalar_select %p345, %s342, 1
        %s347 = smul.addr %s344, 2
        %s348 = sadd.s32 %s346, %s347
        %s349 = smul.addr %s348, 4
        %s350 = scalar_lea.vmem %s0, %s349
        %p351 = pneg %p57
        %p352 = pneg %p54
        %p353 = pneg %p78
        %p354 = pneg %p75
        %p355 = pneg %p99
        %p356 = pneg %p96
        %p357 = pneg %p120
        %p358 = pneg %p117
        %p359 = pneg %p141
        %p360 = pneg %p138
        %p361 = pneg %p162
        %p362 = pneg %p159
        %p363 = pneg %p183
        %p364 = pneg %p180
        %p365 = pneg %p204
        %p366 = pneg %p201
        %p367 = pneg %p225
        %p368 = pneg %p222
        %p369 = pneg %p251
        %p370 = pneg %p248
        %p371 = scmp.lt.s32.totalorder %s26, 1
        %s372 = scalar_select %p371, %s26, 1
        %s373 = smul.addr %s372, 8
        %s374 = scalar_lea.vmem %s9, %s373
        %s375 = smul.u32 2, %s27
        %p376 = scmp.lt.s32.totalorder %s26, 1
        %s377 = scalar_select %p376, %s26, 1
        %p378 = scmp.lt.s32.totalorder %s375, 1
        %s379 = scalar_select %p378, %s375, 1
        %s380 = smul.addr %s377, 2
        %s381 = sadd.s32 %s379, %s380
        %s382 = smul.addr %s381, 4
        %s383 = scalar_lea.vmem %s0, %s382
        %s384 = smul.u32 2, %s27
        %p385 = scmp.lt.s32.totalorder %s26, 1
        %s386 = scalar_select %p385, %s26, 1
        %s387 = smul.addr %s386, 8
        %s388 = scalar_lea.vmem %s9, %s387
        %p390 = scmp.eq.s32.totalorder %s27, 0
        // Predicated region
        $region65: #{se_kws_forward.1} parent=55 // pred_check
          %p391 = pneg %p390
        $region66: #{se_kws_forward.1} parent=55 // pred_check_branch
          %393 = sbr.rel (%p391) target = $region68
        $region67: #{se_kws_forward.1} parent=55 // pred_region
          %394 = vst [vmem:[#allocation2] sm:$0x1] 0.0
        $region68: #{se_kws_forward.1} parent=55 // pred_fallthru
          _
        %v395 = vld [vmem:[%s383] sm:$0xf]
        %v396 = vld [vmem:[%s383 + $0x4] sm:$0xf]
        %v397 = vld [vmem:[#allocation3] sm:$0xf]
        %v398 = vld [vmem:[#allocation3 + $0x4] sm:$0xf]
        %v399 = vld [vmem:[#allocation3 + $0x8] sm:$0xf]
        %v400 = vld [vmem:[#allocation3 + $0xc] sm:$0xf]
        %v401 = vld [vmem:[%s2] sm:$0x1]
        %v403 = vlaneseq
        %v404 = vshrl.u32 %v403, 7
        %v405 = vsub.s32 0, %v404
        %v406 = vrot.slane %v401, %v405
        %v410 = vunpack.c.l.b16 %v395
        %v411 = vunpack.c.l.b16 %v396
        %v412 = vpack.c.b16 %v411, %v410
        %v417 = vunpack.c.l.b16 %v397
        %v418 = vunpack.c.l.b16 %v398
        %v419 = vunpack.c.l.b16 %v399
        %v420 = vunpack.c.l.b16 %v400
        %v421 = vpack.c.b16 %v418, %v417
        %v422 = vpack.c.b16 %v420, %v419
        %vm425 = vcmask 261120
        %v427 = vsel %vm425, %v412, 0
        %429 = vmatprep.subr.bf16.mxu0 0
        %430 = vmatpush1.bf16.msra.mxu0 0
        %431 = vmatprep.subr.bf16.mxu0 0
        %432 = vmatpush1.bf16.msra.mxu0 0
        %433 = vmatprep.subr.bf16.mxu0 0
        %434 = vmatpush1.bf16.msra.mxu0 0
        %435 = vmatprep.subr.bf16.mxu0 0
        %436 = vmatpush1.bf16.msra.mxu0 0
        %437 = vmatprep.subr.bf16.mxu0 0
        %438 = vmatpush1.bf16.msra.mxu0 0
        %439 = vmatprep.subr.bf16.mxu0 0
        %440 = vmatpush1.bf16.msra.mxu0 0
        %441 = vmatprep.subr.bf16.mxu0 0
        %442 = vmatpush1.bf16.msra.mxu0 %v422
        %443 = vmatprep.subr.bf16.mxu0 0
        %444 = vmatpush1.bf16.msra.mxu0 %v421
        %445 = vmatprep.subr.bf16.mxu0 0
        %446 = vmatpush2.bf16.msra.mxu0 0
        %447 = vmatprep.subr.bf16.mxu0 0
        %448 = vmatpush2.bf16.msra.mxu0 0
        %449 = vmatprep.subr.bf16.mxu0 0
        %450 = vmatpush2.bf16.msra.mxu0 0
        %451 = vmatprep.subr.bf16.mxu0 0
        %452 = vmatpush2.bf16.msra.mxu0 0
        %453 = vmatprep.subr.bf16.mxu0 0
        %454 = vmatpush2.bf16.msra.mxu0 0
        %455 = vmatprep.subr.bf16.mxu0 0
        %456 = vmatpush2.bf16.msra.mxu0 0
        %457 = vmatprep.subr.bf16.mxu0 0
        %458 = vmatpush2.bf16.msra.mxu0 0
        %459 = vmatprep.subr.bf16.mxu0 0
        %460 = vmatpush2.bf16.msra.mxu0 0
        %461 = vmatprep.mubr.bf16.mxu0 0
        %462 = vmatmul.mubr.bf16.gmra.mxu0 %v427
        %v463 = vpop.f32.mrf.mxu0
        %v464 = vadd.f32 %v406, %v463
        %v465 = vpop.f32.mrf.mxu0
        %v466 = vpop.f32.mrf.mxu0
        %v467 = vadd.f32 %v406, %v466
        %v468 = vpop.f32.mrf.mxu0
        %469 = vdwg.mxu0
        %v470 = vmax.f32 %v464, 0.0
        %v471 = vmax.f32 %v467, 0.0
        %v472 = vpack.c.bf16 %v471, %v470
        %v473 = vld [vmem:[%s3] sm:$0xf]
        %v474 = vld [vmem:[%s3 + $0x4] sm:$0xf]
        %v475 = vld [vmem:[%s3 + $0x8] sm:$0xf]
        %v476 = vld [vmem:[%s3 + $0xc] sm:$0xf]
        %v477 = vld [vmem:[%s3 + $0x10] sm:$0xf]
        %v478 = vld [vmem:[%s3 + $0x14] sm:$0xf]
        %v479 = vld [vmem:[%s3 + $0x18] sm:$0xf]
        %v480 = vld [vmem:[%s3 + $0x1c] sm:$0xf]
        %v481 = vld [vmem:[%s3 + $0x20] sm:$0xf]
        %v482 = vld [vmem:[%s3 + $0x24] sm:$0xf]
        %v483 = vld [vmem:[%s3 + $0x28] sm:$0xf]
        %v484 = vld [vmem:[%s3 + $0x2c] sm:$0xf]
        %v485 = vld [vmem:[%s3 + $0x30] sm:$0xf]
        %v486 = vld [vmem:[%s3 + $0x34] sm:$0xf]
        %v487 = vld [vmem:[%s3 + $0x38] sm:$0xf]
        %v488 = vld [vmem:[%s3 + $0x3c] sm:$0xf]
        %v489 = vld [vmem:[%s4] sm:$0x1]
        %v491 = vlaneseq
        %v492 = vshrl.u32 %v491, 7
        %v493 = vsub.s32 0, %v492
        %v494 = vrot.slane %v489, %v493
        %v512 = vunpack.c.l.b16 %v473
        %v513 = vunpack.c.l.b16 %v474
        %v514 = vunpack.c.l.b16 %v475
        %v515 = vunpack.c.l.b16 %v476
        %v516 = vunpack.c.l.b16 %v477
        %v517 = vunpack.c.l.b16 %v478
        %v518 = vunpack.c.l.b16 %v479
        %v519 = vunpack.c.l.b16 %v480
        %v520 = vunpack.c.l.b16 %v481
        %v521 = vunpack.c.l.b16 %v482
        %v522 = vunpack.c.l.b16 %v483
        %v523 = vunpack.c.l.b16 %v484
        %v524 = vunpack.c.l.b16 %v485
        %v525 = vunpack.c.l.b16 %v486
        %v526 = vunpack.c.l.b16 %v487
        %v527 = vunpack.c.l.b16 %v488
        %v528 = vpack.c.b16 %v513, %v512
        %v529 = vpack.c.b16 %v515, %v514
        %v530 = vpack.c.b16 %v517, %v516
        %v531 = vpack.c.b16 %v519, %v518
        %v532 = vpack.c.b16 %v521, %v520
        %v533 = vpack.c.b16 %v523, %v522
        %v534 = vpack.c.b16 %v525, %v524
        %v535 = vpack.c.b16 %v527, %v526
        %544 = vmatprep.subr.bf16.mxu0 0
        %545 = vmatpush1.bf16.msra.mxu0 %v535
        %546 = vmatprep.subr.bf16.mxu0 0
        %547 = vmatpush1.bf16.msra.mxu0 %v534
        %548 = vmatprep.subr.bf16.mxu0 0
        %549 = vmatpush1.bf16.msra.mxu0 %v533
        %550 = vmatprep.subr.bf16.mxu0 0
        %551 = vmatpush1.bf16.msra.mxu0 %v532
        %552 = vmatprep.subr.bf16.mxu0 0
        %553 = vmatpush1.bf16.msra.mxu0 %v531
        %554 = vmatprep.subr.bf16.mxu0 0
        %555 = vmatpush1.bf16.msra.mxu0 %v530
        %556 = vmatprep.subr.bf16.mxu0 0
        %557 = vmatpush1.bf16.msra.mxu0 %v529
        %558 = vmatprep.subr.bf16.mxu0 0
        %559 = vmatpush1.bf16.msra.mxu0 %v528
        %560 = vmatprep.subr.bf16.mxu0 0
        %561 = vmatpush2.bf16.msra.mxu0 0
        %562 = vmatprep.subr.bf16.mxu0 0
        %563 = vmatpush2.bf16.msra.mxu0 0
        %564 = vmatprep.subr.bf16.mxu0 0
        %565 = vmatpush2.bf16.msra.mxu0 0
        %566 = vmatprep.subr.bf16.mxu0 0
        %567 = vmatpush2.bf16.msra.mxu0 0
        %568 = vmatprep.subr.bf16.mxu0 0
        %569 = vmatpush2.bf16.msra.mxu0 0
        %570 = vmatprep.subr.bf16.mxu0 0
        %571 = vmatpush2.bf16.msra.mxu0 0
        %572 = vmatprep.subr.bf16.mxu0 0
        %573 = vmatpush2.bf16.msra.mxu0 0
        %574 = vmatprep.subr.bf16.mxu0 0
        %575 = vmatpush2.bf16.msra.mxu0 0
        %576 = vmatprep.mubr.bf16.mxu0 0
        %577 = vmatmul.mubr.bf16.gmra.mxu0 %v472
        %v578 = vpop.f32.mrf.mxu0
        %v579 = vadd.f32 %v494, %v578
        %v580 = vpop.f32.mrf.mxu0
        %v581 = vpop.f32.mrf.mxu0
        %v582 = vadd.f32 %v494, %v581
        %v583 = vpop.f32.mrf.mxu0
        %584 = vdwg.mxu0
        %v585 = vunpack.c.l.bf16 %v395
        %v586 = vunpack.c.l.bf16 %v396
        %v587 = vxor.u32 %v579, 2147483648
        %v588 = vxor.u32 %v582, 2147483648
        %v589 = vmul.f32 %v587, 1.442695
        %v590 = vpow.pop %v589
        %v591 = vmul.f32 %v588, 1.442695
        %v592 = vpow.pop %v591
        %v593 = vadd.f32 %v590, 1.0
        %v594 = vadd.f32 %v592, 1.0
        %v595 = vrcp.pop %v593
        %v596 = vmul.f32 1.0, %v595
        %v597 = vrcp.pop %v594
        %v598 = vmul.f32 1.0, %v597
        %v599 = vmul.f32 %v585, %v596
        %v600 = vmul.f32 %v586, %v598
        %v601 = vpack.c.bf16 %v600, %v599
        %v602 = vld [vmem:[#allocation5] sm:$0xf]
        %v603 = vld [vmem:[#allocation5 + $0x4] sm:$0xf]
        %v604 = vld [vmem:[#allocation5 + $0x8] sm:$0xf]
        %v605 = vld [vmem:[#allocation5 + $0xc] sm:$0xf]
        %v606 = vld [vmem:[%s6] sm:$0x1]
        %v608 = vlaneseq
        %v609 = vshrl.u32 %v608, 7
        %v610 = vsub.s32 0, %v609
        %v611 = vrot.slane %v606, %v610
        %v617 = vunpack.c.l.b16 %v602
        %v618 = vunpack.c.l.b16 %v603
        %v619 = vunpack.c.l.b16 %v604
        %v620 = vunpack.c.l.b16 %v605
        %v621 = vpack.c.b16 %v618, %v617
        %v622 = vpack.c.b16 %v620, %v619
        %v626 = vsel %vm425, %v601, 0
        %628 = vmatprep.subr.bf16.mxu0 0
        %629 = vmatpush1.bf16.msra.mxu0 0
        %630 = vmatprep.subr.bf16.mxu0 0
        %631 = vmatpush1.bf16.msra.mxu0 0
        %632 = vmatprep.subr.bf16.mxu0 0
        %633 = vmatpush1.bf16.msra.mxu0 0
        %634 = vmatprep.subr.bf16.mxu0 0
        %635 = vmatpush1.bf16.msra.mxu0 0
        %636 = vmatprep.subr.bf16.mxu0 0
        %637 = vmatpush1.bf16.msra.mxu0 0
        %638 = vmatprep.subr.bf16.mxu0 0
        %639 = vmatpush1.bf16.msra.mxu0 0
        %640 = vmatprep.subr.bf16.mxu0 0
        %641 = vmatpush1.bf16.msra.mxu0 %v622
        %642 = vmatprep.subr.bf16.mxu0 0
        %643 = vmatpush1.bf16.msra.mxu0 %v621
        %644 = vmatprep.subr.bf16.mxu0 0
        %645 = vmatpush2.bf16.msra.mxu0 0
        %646 = vmatprep.subr.bf16.mxu0 0
        %647 = vmatpush2.bf16.msra.mxu0 0
        %648 = vmatprep.subr.bf16.mxu0 0
        %649 = vmatpush2.bf16.msra.mxu0 0
        %650 = vmatprep.subr.bf16.mxu0 0
        %651 = vmatpush2.bf16.msra.mxu0 0
        %652 = vmatprep.subr.bf16.mxu0 0
        %653 = vmatpush2.bf16.msra.mxu0 0
        %654 = vmatprep.subr.bf16.mxu0 0
        %655 = vmatpush2.bf16.msra.mxu0 0
        %656 = vmatprep.subr.bf16.mxu0 0
        %657 = vmatpush2.bf16.msra.mxu0 0
        %658 = vmatprep.subr.bf16.mxu0 0
        %659 = vmatpush2.bf16.msra.mxu0 0
        %660 = vmatprep.mubr.bf16.mxu0 0
        %661 = vmatmul.mubr.bf16.gmra.mxu0 %v626
        %v662 = vpop.f32.mrf.mxu0
        %v663 = vadd.f32 %v611, %v662
        %v664 = vpop.f32.mrf.mxu0
        %v665 = vpop.f32.mrf.mxu0
        %v666 = vadd.f32 %v611, %v665
        %v667 = vpop.f32.mrf.mxu0
        %668 = vdwg.mxu0
        %v669 = vmax.f32 %v663, 0.0
        %v670 = vmax.f32 %v666, 0.0
        %v671 = vld [vmem:[#allocation2] sm:$0x1]
        %v672 = vadd.f32 %v669, %v670
        %v673 = vrot.slane %v672, 4
        %v674 = vadd.f32 %v672, %v673
        %v675 = vrot.slane %v674, 2
        %v676 = vadd.f32 %v674, %v675
        %v677 = vrot.slane %v676, 1
        %v678 = vadd.f32 %v676, %v677
        %v679 = vadd.f32 %v671, %v678
        %680 = vst [vmem:[#allocation2] sm:$0x1] %v679
        // Predicated region
        $region69: #{se_kws_forward.1} parent=55 // pred_check
          %p681 = pneg %p390
        $region70: #{se_kws_forward.1} parent=55 // pred_check_branch
          %683 = sbr.rel (%p681) target = $region72
        $region71: #{se_kws_forward.1} parent=55 // pred_region
          %v684 = vld [vmem:[#allocation2] sm:$0x1]
          %v685 = vmul.f32 %v684, 0.0625
          %v686 = vld [vmem:[%s7] sm:$0xff]
          %v687 = vld [vmem:[%s7 + $0x8] sm:$0xff]
          %v688 = vld [vmem:[%s7 + $0x10] sm:$0xff]
          %v689 = vld [vmem:[%s7 + $0x18] sm:$0xff]
          %v690 = vld [vmem:[%s7 + $0x20] sm:$0xff]
          %v691 = vld [vmem:[%s7 + $0x28] sm:$0xff]
          %v692 = vld [vmem:[%s7 + $0x30] sm:$0xff]
          %v693 = vld [vmem:[%s7 + $0x38] sm:$0xff]
          %v694 = vld [vmem:[%s7 + $0x40] sm:$0xff]
          %v695 = vld [vmem:[%s7 + $0x48] sm:$0xff]
          %v696 = vld [vmem:[%s7 + $0x50] sm:$0xff]
          %v697 = vld [vmem:[%s7 + $0x58] sm:$0xff]
          %v698 = vld [vmem:[%s7 + $0x60] sm:$0xff]
          %v699 = vld [vmem:[%s7 + $0x68] sm:$0xff]
          %v700 = vld [vmem:[%s7 + $0x70] sm:$0xff]
          %v701 = vld [vmem:[%s7 + $0x78] sm:$0xff]
          %v702 = vld [vmem:[%s8] sm:$0x1]
          %703 = vmatprep.subr.mxu0 0.0
          %704 = vmatpush1.msra.mxu0 %v701
          %705 = vmatprep.subr.mxu0 0.0
          %706 = vmatpush1.msra.mxu0 %v700
          %707 = vmatprep.subr.mxu0 0.0
          %708 = vmatpush1.msra.mxu0 %v699
          %709 = vmatprep.subr.mxu0 0.0
          %710 = vmatpush1.msra.mxu0 %v698
          %711 = vmatprep.subr.mxu0 0.0
          %712 = vmatpush1.msra.mxu0 %v697
          %713 = vmatprep.subr.mxu0 0.0
          %714 = vmatpush1.msra.mxu0 %v696
          %715 = vmatprep.subr.mxu0 0.0
          %716 = vmatpush1.msra.mxu0 %v695
          %717 = vmatprep.subr.mxu0 0.0
          %718 = vmatpush1.msra.mxu0 %v694
          %719 = vmatprep.subr.mxu0 0.0
          %720 = vmatpush1.msra.mxu0 %v693
          %721 = vmatprep.subr.mxu0 0.0
          %722 = vmatpush1.msra.mxu0 %v692
          %723 = vmatprep.subr.mxu0 0.0
          %724 = vmatpush1.msra.mxu0 %v691
          %725 = vmatprep.subr.mxu0 0.0
          %726 = vmatpush1.msra.mxu0 %v690
          %727 = vmatprep.subr.mxu0 0.0
          %728 = vmatpush1.msra.mxu0 %v689
          %729 = vmatprep.subr.mxu0 0.0
          %730 = vmatpush1.msra.mxu0 %v688
          %731 = vmatprep.subr.mxu0 0.0
          %732 = vmatpush1.msra.mxu0 %v687
          %733 = vmatprep.subr.mxu0 0.0
          %734 = vmatpush1.msra.mxu0 %v686
          %735 = vmatprep.subr.mxu0 0.0
          %736 = vmatpush2.msra.mxu0 0.0
          %737 = vmatprep.subr.mxu0 0.0
          %738 = vmatpush2.msra.mxu0 0.0
          %739 = vmatprep.subr.mxu0 0.0
          %740 = vmatpush2.msra.mxu0 0.0
          %741 = vmatprep.subr.mxu0 0.0
          %742 = vmatpush2.msra.mxu0 0.0
          %743 = vmatprep.subr.mxu0 0.0
          %744 = vmatpush2.msra.mxu0 0.0
          %745 = vmatprep.subr.mxu0 0.0
          %746 = vmatpush2.msra.mxu0 0.0
          %747 = vmatprep.subr.mxu0 0.0
          %748 = vmatpush2.msra.mxu0 0.0
          %749 = vmatprep.subr.mxu0 0.0
          %750 = vmatpush2.msra.mxu0 0.0
          %751 = vmatprep.subr.mxu0 0.0
          %752 = vmatpush2.msra.mxu0 0.0
          %753 = vmatprep.subr.mxu0 0.0
          %754 = vmatpush2.msra.mxu0 0.0
          %755 = vmatprep.subr.mxu0 0.0
          %756 = vmatpush2.msra.mxu0 0.0
          %757 = vmatprep.subr.mxu0 0.0
          %758 = vmatpush2.msra.mxu0 0.0
          %759 = vmatprep.subr.mxu0 0.0
          %760 = vmatpush2.msra.mxu0 0.0
          %761 = vmatprep.subr.mxu0 0.0
          %762 = vmatpush2.msra.mxu0 0.0
          %763 = vmatprep.subr.mxu0 0.0
          %764 = vmatpush2.msra.mxu0 0.0
          %765 = vmatprep.subr.mxu0 0.0
          %766 = vmatpush2.msra.mxu0 0.0
          %767 = vmatprep.mubr.f32.mxu0 0.0
          %768 = vmatmul.mubr.f32.gmra.mxu0 %v685
          %v769 = vpop.f32.mrf.mxu0
          %v770 = vadd.f32 %v702, %v769
          %v771 = vpop.f32.mrf.mxu0
          %772 = vdwg.mxu0
          %v773 = vlaneseq
          %v774 = vshrl.u32 %v773, 7
          %v775 = vsub.s32 0, %v774
          %v776 = vrot.slane %v770, %v775
          %777 = vst [vmem:[%s388] sm:$0xff] %v776
        $region72: #{se_kws_forward.1} parent=55 // pred_fallthru
          _
        %p778 = scmp.lt.s32.totalorder %s26, 1
        %s779 = scalar_select %p778, %s26, 1
        %s780 = smul.addr %s779, 8
        %s781 = scalar_lea.vmem %s9, %s780
        // Predicated region
        $region73: #{se_kws_forward.1} parent=55 // pred_check
          %p782 = pneg %p248
        $region74: #{se_kws_forward.1} parent=55 // pred_check_branch
          %784 = sbr.rel (%p782) target = $region76
        $region75: #{se_kws_forward.1} parent=55 // pred_region
          _
        $region76: #{se_kws_forward.1} parent=55 // pred_fallthru
          _
      $region56: #{se_kws_forward.1} parent=5 // pred_fallthru
        _
      %p785 = scmp.le.s32.totalorder 2, %s17
      // Predicated region
      $region77: #{se_kws_forward.1} parent=5 // pred_check
        %p786 = pneg %p785
      $region78: #{se_kws_forward.1} parent=5 // pred_check_branch
        %788 = sbr.rel (%p786) target = $region80
      $region79: #{se_kws_forward.1} parent=5 // pred_region
        %s789 = ssub.s32 %s17, 2
        // Predicated region
        $region81: #{se_kws_forward.1} parent=79 // pred_check
          %p790 = pneg %p254
        $region82: #{se_kws_forward.1} parent=79 // pred_check_branch
          %792 = sbr.rel (%p790) target = $region84
        $region83: #{se_kws_forward.1} parent=79 // pred_region
          %p793 = scmp.lt.s32.totalorder %s28, 1
          %s794 = scalar_select %p793, %s28, 1
          %s795 = smul.addr %s794, 8
          %s796 = scalar_lea.vmem %s9, %s795
        $region84: #{se_kws_forward.1} parent=79 // pred_fallthru
          _
      $region80: #{se_kws_forward.1} parent=5 // pred_fallthru
        _
    $region6: #{se_kws_forward.1} parent=1 // loop_footer
      %s21 = sadd.s32 1, %s17
    $region7: #{se_kws_forward.1} parent=1 // loop_footer_branch
      %16 = sbr.rel target = $region3
    $region8: #{se_kws_forward.1} parent=1 // loop_exit
      _
    %797 = vsyncpa [#allocation4], 1
    %s798 = scalar_lea.sflag [#allocation4], 1
    %799 = vsyncpa %s798, 1
    %800 = vsyncpa [#allocation6], 1

</llo_original>
